<compile_context>
chip_gen: v7x
topology: tpu7x:2x2x1
jax: 0.10.0
libtpu: 0.0.40
codegen_flags: <defaults>
</compile_context>

<pallas_src>
from functools import partial

import jax
import jax.numpy as jnp
import numpy as np
from jax.experimental import pallas as pl
from jax.experimental.pallas import tpu as pltpu


# ---------------------------------------------------------------------------
# Fused kernel: conv1+bn1+relu -> conv2+bn2+residual+relu   (one image / step)
# ---------------------------------------------------------------------------
def _fused_basic_block_kernel(x_ref, m_ref, w1_ref, b1_ref, w2_ref, b2_ref,
                              o_ref, xpad_ref, hpad_ref, *, H, W, P, C_out):
    HW = H * W
    Cp = xpad_ref.shape[0]
    f32 = jnp.float32

    # Load the input once; reused both to fill the padded scratch and for the
    # residual add (no second read of x_ref).
    x = x_ref[0].astype(f32)                                   # (Cp, HW)

    # Halo-only zeroing (interior is fully overwritten right below).  Done every
    # step (cheap, a few KB) so it stays correct when the "parallel" grid axis is
    # split across cores and this core never ran step 0.
    zero_halo = jnp.zeros((Cp, P), f32)
    xpad_ref[:, :P] = zero_halo
    xpad_ref[:, P + HW:P + HW + P] = zero_halo
    hpad_ref[:, :P] = zero_halo
    hpad_ref[:, P + HW:P + HW + P] = zero_halo

    # Fill the padded-x interior (lane-aligned full-tile store, P % 128 == 0).
    xpad_ref[:, P:P + HW] = x

    # Precomputed dx row-wrap masks (0/1), passed in from the wrapper.
    mask_l = m_ref[0:1, :]        # (1, HW): column w > 0       (tap dx = -1)
    mask_r = m_ref[1:2, :]        # (1, HW): column w < W - 1   (tap dx = +1)

    def im2col(src_ref):
        """(Cp, HW + 2P) zero-halo flat image -> (9*Cp, HW) bf16 im2col slab.

        Tap order = (dy+1)*3 + (dx+1), matching the weight packing.  Vertical
        (dy) out-of-range reads land in the zeroed halo; horizontal (dx) row
        wrap is killed by the precomputed column masks.  Pieces are f32
        (Cp, HW) sublane-tile-aligned views, so the concat is pure vreg
        placement; the single cast to bf16 feeds the MXU.
        """
        taps = []
        for dy in (-1, 0, 1):
            for dx in (-1, 0, 1):
                start = P + dy * W + dx                 # static lane offset
                t = src_ref[:, start:start + HW]        # (Cp, HW) f32
                if dx == -1:
                    t = t * mask_l
                elif dx == 1:
                    t = t * mask_r
                taps.append(t)
        return jnp.concatenate(taps, axis=0).astype(jnp.bfloat16)

    # conv1 + folded-bn1 + relu : ONE bf16 MXU matmul (K = 9*Cp), f32 accumulate,
    # f32 epilogue; intermediate h stays in VMEM.
    h = jnp.dot(w1_ref[...], im2col(xpad_ref), preferred_element_type=f32)
    h = jnp.maximum(h + b1_ref[...], 0.0)
    hpad_ref[:, P:P + HW] = h

    # conv2 + folded-bn2 + residual + relu : ONE matmul, fused f32 epilogue,
    # single lane-dense output store.
    out = jnp.dot(w2_ref[...], im2col(hpad_ref), preferred_element_type=f32)
    out = jnp.maximum(out + b2_ref[...] + x, 0.0)
    o_ref[...] = out[:C_out][None].astype(o_ref.dtype)


# ---------------------------------------------------------------------------
# Wrapper
# ---------------------------------------------------------------------------
def basic_block_forward(x_nchw, params):
    """BasicBlock forward. x_nchw: (N, C, H, W) float32 (PyTorch convention)."""
    N, C, H, W = x_nchw.shape
    HW = H * W

    w1, w2 = params["w1"], params["w2"]        # OIHW (Cout, Cin, 3, 3)
    s1, b1 = params["s1"], params["b1"]        # (C,)
    s2, b2 = params["s2"], params["b2"]
    planes = w1.shape[0]
    assert C == planes and w1.shape[1] == C, \
        "downsample=None requires inplanes == planes"
    # Lane-dense layout requirement; pad W per row-strip otherwise (see header).
    assert HW % 128 == 0, "H*W must be a multiple of 128 for the flat layout"

    Cp = max(8, ((C + 7) // 8) * 8)            # channels rounded to sublane tile

    def fold_pack(w_oihw, scale):
        # Fold BN scale into the conv weights, pad channels to Cp, and repack
        # OIHW -> (Cp, 9*Cp) bf16 with contraction index = tap*Cp + cin,
        # tap = (dy+1)*3 + (dx+1)  (matches the kernel's im2col ordering).
        cout, cin = w_oihw.shape[0], w_oihw.shape[1]
        wf = w_oihw * scale[:, None, None, None]              # (Cout, Cin, 3, 3)
        wf = jnp.transpose(wf, (0, 2, 3, 1))                  # (Cout, 3, 3, Cin)
        wf = jnp.pad(wf, ((0, Cp - cout), (0, 0), (0, 0), (0, Cp - cin)))
        return wf.reshape(Cp, 9 * Cp).astype(jnp.bfloat16)

    w1_2d = fold_pack(w1, s1)
    w2_2d = fold_pack(w2, s2)
    b1_c = jnp.pad(b1, (0, Cp - planes)).reshape(Cp, 1).astype(jnp.float32)
    b2_c = jnp.pad(b2, (0, Cp - planes)).reshape(Cp, 1).astype(jnp.float32)

    # NCHW -> (N, Cp, H*W): free reshape + (usually zero-width) channel pad.
    x_p = jnp.pad(x_nchw, ((0, 0), (0, Cp - C), (0, 0), (0, 0))).reshape(N, Cp, HW)

    # dx row-wrap masks, computed ONCE here (not per grid step in the kernel).
    ww = jnp.arange(HW, dtype=jnp.int32) % W
    masks = jnp.stack([(ww > 0), (ww < W - 1)]).astype(jnp.float32)   # (2, HW)

    P = 128  # left/right halo on the flat axis; lane-aligned, only needs >= W+1

    kernel = partial(_fused_basic_block_kernel, H=H, W=W, P=P, C_out=planes)

    flops = 2 * N * 2 * Cp * (9 * Cp) * HW                     # two convs
    bytes_accessed = (x_p.size * 4 + N * planes * HW * 4
                      + (w1_2d.size + w2_2d.size) * 2
                      + (b1_c.size + b2_c.size + masks.size) * 4)

    out_flat = pl.pallas_call(
        kernel,
        out_shape=jax.ShapeDtypeStruct((N, planes, HW), x_nchw.dtype),
        grid_spec=pltpu.PrefetchScalarGridSpec(
            num_scalar_prefetch=0,
            grid=(N,),
            in_specs=[
                pl.BlockSpec((1, Cp, HW), lambda n: (n, 0, 0)),      # x (padded C)
                pl.BlockSpec((2, HW), lambda n: (0, 0)),             # dx masks
                pl.BlockSpec((Cp, 9 * Cp), lambda n: (0, 0)),        # w1 folded bf16
                pl.BlockSpec((Cp, 1), lambda n: (0, 0)),             # b1
                pl.BlockSpec((Cp, 9 * Cp), lambda n: (0, 0)),        # w2 folded bf16
                pl.BlockSpec((Cp, 1), lambda n: (0, 0)),             # b2
            ],
            out_specs=pl.BlockSpec((1, planes, HW), lambda n: (n, 0, 0)),
            scratch_shapes=[
                pltpu.VMEM((Cp, HW + 2 * P), jnp.float32),   # padded x (zero halo)
                pltpu.VMEM((Cp, HW + 2 * P), jnp.float32),   # padded h (VMEM-resident)
            ],
        ),
        compiler_params=pltpu.CompilerParams(
            dimension_semantics=("parallel",),
            vmem_limit_bytes=32 * 1024 * 1024,   # explicit, well above footprint
        ),
        cost_estimate=pl.CostEstimate(flops=flops, transcendentals=0,
                                      bytes_accessed=bytes_accessed),
    )(x_p, masks, w1_2d, b1_c, w2_2d, b2_c)

    return out_flat.reshape(N, planes, H, W)


# ---------------------------------------------------------------------------
# Deterministic parameter construction (BasicBlock(inplanes=4, planes=4))
# ---------------------------------------------------------------------------
def make_params(inplanes, planes, key):
    ks = jax.random.split(key, 10)
    eps = 1e-5

    def conv_w(k, cin, cout):
        # PyTorch layout (out, in, kh, kw)
        return jax.random.normal(k, (cout, cin, 3, 3), jnp.float32) * 0.1

    def bn_fold(kg, kb, km, kv, c):
        gamma = 1.0 + 0.1 * jax.random.normal(kg, (c,), jnp.float32)
        beta = 0.1 * jax.random.normal(kb, (c,), jnp.float32)
        mean = 0.1 * jax.random.normal(km, (c,), jnp.float32)
        var = jax.random.uniform(kv, (c,), jnp.float32, 0.5, 1.5)
        scale = gamma / jnp.sqrt(var + eps)
        bias = beta - mean * scale
        return scale, bias

    w1 = conv_w(ks[0], inplanes, planes)
    w2 = conv_w(ks[1], planes, planes)
    s1, b1 = bn_fold(ks[2], ks[3], ks[4], ks[5], planes)
    s2, b2 = bn_fold(ks[6], ks[7], ks[8], ks[9], planes)
    return {"w1": w1, "w2": w2, "s1": s1, "b1": b1, "s2": s2, "b2": b2}


# Plain-JAX reference (NCHW) for correctness check.
def reference_forward(x, p):
    conv = lambda a, w: jax.lax.conv_general_dilated(
        a, w, (1, 1), "SAME", dimension_numbers=("NCHW", "OIHW", "NCHW"))
    s1 = p["s1"].reshape(1, -1, 1, 1); b1 = p["b1"].reshape(1, -1, 1, 1)
    s2 = p["s2"].reshape(1, -1, 1, 1); b2 = p["b2"].reshape(1, -1, 1, 1)
    h = jnp.maximum(conv(x, p["w1"]) * s1 + b1, 0.0)
    o = conv(h, p["w2"]) * s2 + b2 + x
    return jnp.maximum(o, 0.0)


if __name__ == "__main__":
    key = jax.random.PRNGKey(0)
    kx, kp = jax.random.split(key)

    N, C, H, W = 2, 4, 16, 16          # inplanes = planes = 4, stride = 1
    x = jax.random.normal(kx, (N, C, H, W), jnp.float32)
    params = make_params(C, C, kp)

    fwd = jax.jit(basic_block_forward)
    out = jax.block_until_ready(fwd(x, params))

    ref = reference_forward(x, params)
    # bf16 MXU operands (f32 accumulate / epilogue): loosened tolerance vs f32 ref.
    np.testing.assert_allclose(np.asarray(out), np.asarray(ref),
                               rtol=3e-2, atol=3e-2)
    print("KERNEL_OK")
</pallas_src>

<mosaic_0001>
module attributes {stable_mosaic.version = 11 : i64} {
  func.func @_fused_basic_block_kernel(%arg0: i32, %arg1: memref<1x8x256xf32, #tpu.memory_space<vmem>>, %arg2: memref<2x256xf32, #tpu.memory_space<vmem>>, %arg3: memref<8x72xbf16, #tpu.memory_space<vmem>>, %arg4: memref<8x1xf32, #tpu.memory_space<vmem>>, %arg5: memref<8x72xbf16, #tpu.memory_space<vmem>>, %arg6: memref<8x1xf32, #tpu.memory_space<vmem>>, %arg7: memref<1x4x256xf32, #tpu.memory_space<vmem>>, %arg8: memref<8x512xf32, #tpu.memory_space<vmem>>, %arg9: memref<8x512xf32, #tpu.memory_space<vmem>>) attributes {dimension_semantics = [#tpu.dimension_semantics<parallel>], iteration_bounds = array<i64: 2>, scalar_prefetch = 0 : i64, scratch_operands = 2 : i64, tpu.core_type = #tpu.core_type<tc>, window_params = [{transform_indices = @transform_0, window_bounds = array<i64: 1, 8, 256>}, {pipeline_mode = #tpu.pipeline_mode<synchronous>, transform_indices = @transform_1, window_bounds = array<i64: 2, 256>}, {pipeline_mode = #tpu.pipeline_mode<synchronous>, transform_indices = @transform_2, window_bounds = array<i64: 8, 72>}, {pipeline_mode = #tpu.pipeline_mode<synchronous>, transform_indices = @transform_3, window_bounds = array<i64: 8, 1>}, {pipeline_mode = #tpu.pipeline_mode<synchronous>, transform_indices = @transform_4, window_bounds = array<i64: 8, 72>}, {pipeline_mode = #tpu.pipeline_mode<synchronous>, transform_indices = @transform_5, window_bounds = array<i64: 8, 1>}, {transform_indices = @transform_6, window_bounds = array<i64: 1, 4, 256>}]} {
    %c0 = arith.constant 0 : index
    %c0_0 = arith.constant 0 : index
    %c0_1 = arith.constant 0 : index
    %0 = vector.load %arg1[%c0, %c0_0, %c0_1] : memref<1x8x256xf32, #tpu.memory_space<vmem>>, vector<1x8x256xf32>
    %1 = vector.shape_cast %0 : vector<1x8x256xf32> to vector<8x256xf32>
    %cst = arith.constant 0.000000e+00 : f32
    %2 = vector.broadcast %cst : f32 to vector<8x128xf32>
    %c0_2 = arith.constant 0 : index
    %c0_3 = arith.constant 0 : index
    %3 = vector.load %arg8[%c0_2, %c0_3] : memref<8x512xf32, #tpu.memory_space<vmem>>, vector<8x128xf32>
    tpu.vector_store %arg8[%c0_2, %c0_3], %2 {strides = array<i32>} : memref<8x512xf32, #tpu.memory_space<vmem>>, vector<8x128xf32>,
    %c0_4 = arith.constant 0 : index
    %c384 = arith.constant 384 : index
    %4 = vector.load %arg8[%c0_4, %c384] : memref<8x512xf32, #tpu.memory_space<vmem>>, vector<8x128xf32>
    tpu.vector_store %arg8[%c0_4, %c384], %2 {strides = array<i32>} : memref<8x512xf32, #tpu.memory_space<vmem>>, vector<8x128xf32>,
    %c0_5 = arith.constant 0 : index
    %c0_6 = arith.constant 0 : index
    %5 = vector.load %arg9[%c0_5, %c0_6] : memref<8x512xf32, #tpu.memory_space<vmem>>, vector<8x128xf32>
    tpu.vector_store %arg9[%c0_5, %c0_6], %2 {strides = array<i32>} : memref<8x512xf32, #tpu.memory_space<vmem>>, vector<8x128xf32>,
    %c0_7 = arith.constant 0 : index
    %c384_8 = arith.constant 384 : index
    %6 = vector.load %arg9[%c0_7, %c384_8] : memref<8x512xf32, #tpu.memory_space<vmem>>, vector<8x128xf32>
    tpu.vector_store %arg9[%c0_7, %c384_8], %2 {strides = array<i32>} : memref<8x512xf32, #tpu.memory_space<vmem>>, vector<8x128xf32>,
    %c0_9 = arith.constant 0 : index
    %c128 = arith.constant 128 : index
    %7 = vector.load %arg8[%c0_9, %c128] : memref<8x512xf32, #tpu.memory_space<vmem>>, vector<8x256xf32>
    tpu.vector_store %arg8[%c0_9, %c128], %1 {strides = array<i32>} : memref<8x512xf32, #tpu.memory_space<vmem>>, vector<8x256xf32>,
    %c0_10 = arith.constant 0 : index
    %c0_11 = arith.constant 0 : index
    %8 = vector.load %arg2[%c0_10, %c0_11] : memref<2x256xf32, #tpu.memory_space<vmem>>, vector<1x256xf32>
    %c1 = arith.constant 1 : index
    %c0_12 = arith.constant 0 : index
    %9 = vector.load %arg2[%c1, %c0_12] : memref<2x256xf32, #tpu.memory_space<vmem>>, vector<1x256xf32>
    %c0_13 = arith.constant 0 : index
    %c0_14 = arith.constant 0 : index
    %10 = vector.load %arg3[%c0_13, %c0_14] : memref<8x72xbf16, #tpu.memory_space<vmem>>, vector<8x72xbf16>
    %c0_15 = arith.constant 0 : index
    %c111 = arith.constant 111 : index
    %11 = vector.load %arg8[%c0_15, %c111] : memref<8x512xf32, #tpu.memory_space<vmem>>, vector<8x256xf32>
    %12 = vector.broadcast %8 : vector<1x256xf32> to vector<8x256xf32>
    %13 = arith.mulf %11, %12 : vector<8x256xf32>
    %c0_16 = arith.constant 0 : index
    %c112 = arith.constant 112 : index
    %14 = vector.load %arg8[%c0_16, %c112] : memref<8x512xf32, #tpu.memory_space<vmem>>, vector<8x256xf32>
    %c0_17 = arith.constant 0 : index
    %c113 = arith.constant 113 : index
    %15 = vector.load %arg8[%c0_17, %c113] : memref<8x512xf32, #tpu.memory_space<vmem>>, vector<8x256xf32>
    %16 = vector.broadcast %9 : vector<1x256xf32> to vector<8x256xf32>
    %17 = arith.mulf %15, %16 : vector<8x256xf32>
    %c0_18 = arith.constant 0 : index
    %c127 = arith.constant 127 : index
    %18 = vector.load %arg8[%c0_18, %c127] : memref<8x512xf32, #tpu.memory_space<vmem>>, vector<8x256xf32>
    %19 = vector.broadcast %8 : vector<1x256xf32> to vector<8x256xf32>
    %20 = arith.mulf %18, %19 : vector<8x256xf32>
    %c0_19 = arith.constant 0 : index
    %c128_20 = arith.constant 128 : index
    %21 = vector.load %arg8[%c0_19, %c128_20] : memref<8x512xf32, #tpu.memory_space<vmem>>, vector<8x256xf32>
    %c0_21 = arith.constant 0 : index
    %c129 = arith.constant 129 : index
    %22 = vector.load %arg8[%c0_21, %c129] : memref<8x512xf32, #tpu.memory_space<vmem>>, vector<8x256xf32>
    %23 = vector.broadcast %9 : vector<1x256xf32> to vector<8x256xf32>
    %24 = arith.mulf %22, %23 : vector<8x256xf32>
    %c0_22 = arith.constant 0 : index
    %c143 = arith.constant 143 : index
    %25 = vector.load %arg8[%c0_22, %c143] : memref<8x512xf32, #tpu.memory_space<vmem>>, vector<8x256xf32>
    %26 = vector.broadcast %8 : vector<1x256xf32> to vector<8x256xf32>
    %27 = arith.mulf %25, %26 : vector<8x256xf32>
    %c0_23 = arith.constant 0 : index
    %c144 = arith.constant 144 : index
    %28 = vector.load %arg8[%c0_23, %c144] : memref<8x512xf32, #tpu.memory_space<vmem>>, vector<8x256xf32>
    %c0_24 = arith.constant 0 : index
    %c145 = arith.constant 145 : index
    %29 = vector.load %arg8[%c0_24, %c145] : memref<8x512xf32, #tpu.memory_space<vmem>>, vector<8x256xf32>
    %30 = vector.broadcast %9 : vector<1x256xf32> to vector<8x256xf32>
    %31 = arith.mulf %29, %30 : vector<8x256xf32>
    %32 = tpu.concatenate %13, %14, %17, %20, %21, %24, %27, %28, %31 in 0 : vector<8x256xf32>, vector<8x256xf32>, vector<8x256xf32>, vector<8x256xf32>, vector<8x256xf32>, vector<8x256xf32>, vector<8x256xf32>, vector<8x256xf32>, vector<8x256xf32> -> vector<72x256xf32>
    %33 = arith.truncf %32 : vector<72x256xf32> to vector<72x256xbf16>
    %cst_25 = arith.constant dense<0.000000e+00> : vector<8x256xf32>
    %34 = tpu.matmul %10, %33, %cst_25 {dimension_numbers = #tpu.dot_dimension_numbers<[1], [0], [0], [1], [0, 0, 1, 1], [], []>} : vector<8x72xbf16>, vector<72x256xbf16>, vector<8x256xf32> -> vector<8x256xf32>
    %c0_26 = arith.constant 0 : index
    %c0_27 = arith.constant 0 : index
    %35 = vector.load %arg4[%c0_26, %c0_27] : memref<8x1xf32, #tpu.memory_space<vmem>>, vector<8x1xf32>
    %36 = vector.broadcast %35 : vector<8x1xf32> to vector<8x256xf32>
    %37 = arith.addf %34, %36 : vector<8x256xf32>
    %cst_28 = arith.constant 0.000000e+00 : f32
    %38 = vector.broadcast %cst_28 : f32 to vector<8x256xf32>
    %39 = arith.maximumf %37, %38 : vector<8x256xf32>
    %c0_29 = arith.constant 0 : index
    %c128_30 = arith.constant 128 : index
    %40 = vector.load %arg9[%c0_29, %c128_30] : memref<8x512xf32, #tpu.memory_space<vmem>>, vector<8x256xf32>
    tpu.vector_store %arg9[%c0_29, %c128_30], %39 {strides = array<i32>} : memref<8x512xf32, #tpu.memory_space<vmem>>, vector<8x256xf32>,
    %c0_31 = arith.constant 0 : index
    %c0_32 = arith.constant 0 : index
    %41 = vector.load %arg5[%c0_31, %c0_32] : memref<8x72xbf16, #tpu.memory_space<vmem>>, vector<8x72xbf16>
    %c0_33 = arith.constant 0 : index
    %c111_34 = arith.constant 111 : index
    %42 = vector.load %arg9[%c0_33, %c111_34] : memref<8x512xf32, #tpu.memory_space<vmem>>, vector<8x256xf32>
    %43 = vector.broadcast %8 : vector<1x256xf32> to vector<8x256xf32>
    %44 = arith.mulf %42, %43 : vector<8x256xf32>
    %c0_35 = arith.constant 0 : index
    %c112_36 = arith.constant 112 : index
    %45 = vector.load %arg9[%c0_35, %c112_36] : memref<8x512xf32, #tpu.memory_space<vmem>>, vector<8x256xf32>
    %c0_37 = arith.constant 0 : index
    %c113_38 = arith.constant 113 : index
    %46 = vector.load %arg9[%c0_37, %c113_38] : memref<8x512xf32, #tpu.memory_space<vmem>>, vector<8x256xf32>
    %47 = vector.broadcast %9 : vector<1x256xf32> to vector<8x256xf32>
    %48 = arith.mulf %46, %47 : vector<8x256xf32>
    %c0_39 = arith.constant 0 : index
    %c127_40 = arith.constant 127 : index
    %49 = vector.load %arg9[%c0_39, %c127_40] : memref<8x512xf32, #tpu.memory_space<vmem>>, vector<8x256xf32>
    %50 = vector.broadcast %8 : vector<1x256xf32> to vector<8x256xf32>
    %51 = arith.mulf %49, %50 : vector<8x256xf32>
    %c0_41 = arith.constant 0 : index
    %c128_42 = arith.constant 128 : index
    %52 = vector.load %arg9[%c0_41, %c128_42] : memref<8x512xf32, #tpu.memory_space<vmem>>, vector<8x256xf32>
    %c0_43 = arith.constant 0 : index
    %c129_44 = arith.constant 129 : index
    %53 = vector.load %arg9[%c0_43, %c129_44] : memref<8x512xf32, #tpu.memory_space<vmem>>, vector<8x256xf32>
    %54 = vector.broadcast %9 : vector<1x256xf32> to vector<8x256xf32>
    %55 = arith.mulf %53, %54 : vector<8x256xf32>
    %c0_45 = arith.constant 0 : index
    %c143_46 = arith.constant 143 : index
    %56 = vector.load %arg9[%c0_45, %c143_46] : memref<8x512xf32, #tpu.memory_space<vmem>>, vector<8x256xf32>
    %57 = vector.broadcast %8 : vector<1x256xf32> to vector<8x256xf32>
    %58 = arith.mulf %56, %57 : vector<8x256xf32>
    %c0_47 = arith.constant 0 : index
    %c144_48 = arith.constant 144 : index
    %59 = vector.load %arg9[%c0_47, %c144_48] : memref<8x512xf32, #tpu.memory_space<vmem>>, vector<8x256xf32>
    %c0_49 = arith.constant 0 : index
    %c145_50 = arith.constant 145 : index
    %60 = vector.load %arg9[%c0_49, %c145_50] : memref<8x512xf32, #tpu.memory_space<vmem>>, vector<8x256xf32>
    %61 = vector.broadcast %9 : vector<1x256xf32> to vector<8x256xf32>
    %62 = arith.mulf %60, %61 : vector<8x256xf32>
    %63 = tpu.concatenate %44, %45, %48, %51, %52, %55, %58, %59, %62 in 0 : vector<8x256xf32>, vector<8x256xf32>, vector<8x256xf32>, vector<8x256xf32>, vector<8x256xf32>, vector<8x256xf32>, vector<8x256xf32>, vector<8x256xf32>, vector<8x256xf32> -> vector<72x256xf32>
    %64 = arith.truncf %63 : vector<72x256xf32> to vector<72x256xbf16>
    %cst_51 = arith.constant dense<0.000000e+00> : vector<8x256xf32>
    %65 = tpu.matmul %41, %64, %cst_51 {dimension_numbers = #tpu.dot_dimension_numbers<[1], [0], [0], [1], [0, 0, 1, 1], [], []>} : vector<8x72xbf16>, vector<72x256xbf16>, vector<8x256xf32> -> vector<8x256xf32>
    %c0_52 = arith.constant 0 : index
    %c0_53 = arith.constant 0 : index
    %66 = vector.load %arg6[%c0_52, %c0_53] : memref<8x1xf32, #tpu.memory_space<vmem>>, vector<8x1xf32>
    %67 = vector.broadcast %66 : vector<8x1xf32> to vector<8x256xf32>
    %68 = arith.addf %65, %67 : vector<8x256xf32>
    %69 = arith.addf %68, %1 : vector<8x256xf32>
    %cst_54 = arith.constant 0.000000e+00 : f32
    %70 = vector.broadcast %cst_54 : f32 to vector<8x256xf32>
    %71 = arith.maximumf %69, %70 : vector<8x256xf32>
    %72 = vector.extract_strided_slice %71 {offsets = [0, 0], sizes = [4, 256], strides = [1, 1]} : vector<8x256xf32> to vector<4x256xf32>
    %73 = vector.shape_cast %72 : vector<4x256xf32> to vector<1x4x256xf32>
    %c0_55 = arith.constant 0 : index
    %c0_56 = arith.constant 0 : index
    %c0_57 = arith.constant 0 : index
    %74 = vector.load %arg7[%c0_55, %c0_56, %c0_57] : memref<1x4x256xf32, #tpu.memory_space<vmem>>, vector<1x4x256xf32>
    tpu.vector_store %arg7[%c0_55, %c0_56, %c0_57], %73 {strides = array<i32>} : memref<1x4x256xf32, #tpu.memory_space<vmem>>, vector<1x4x256xf32>,
    return
  }
  func.func @transform_0(%arg0: i32) -> (i32, i32, i32) {
    %c0_i32 = arith.constant 0 : i32
    %c0_i32_0 = arith.constant 0 : i32
    %c0_i32_1 = arith.constant 0 : i32
    return %arg0, %c0_i32, %c0_i32_0 : i32, i32, i32
  }
  func.func @transform_1(%arg0: i32) -> (i32, i32) {
    %c0_i32 = arith.constant 0 : i32
    %c0_i32_0 = arith.constant 0 : i32
    %c0_i32_1 = arith.constant 0 : i32
    return %c0_i32, %c0_i32_0 : i32, i32
  }
  func.func @transform_2(%arg0: i32) -> (i32, i32) {
    %c0_i32 = arith.constant 0 : i32
    %c0_i32_0 = arith.constant 0 : i32
    %c0_i32_1 = arith.constant 0 : i32
    return %c0_i32, %c0_i32_0 : i32, i32
  }
  func.func @transform_3(%arg0: i32) -> (i32, i32) {
    %c0_i32 = arith.constant 0 : i32
    %c0_i32_0 = arith.constant 0 : i32
    %c0_i32_1 = arith.constant 0 : i32
    return %c0_i32, %c0_i32_0 : i32, i32
  }
  func.func @transform_4(%arg0: i32) -> (i32, i32) {
    %c0_i32 = arith.constant 0 : i32
    %c0_i32_0 = arith.constant 0 : i32
    %c0_i32_1 = arith.constant 0 : i32
    return %c0_i32, %c0_i32_0 : i32, i32
  }
  func.func @transform_5(%arg0: i32) -> (i32, i32) {
    %c0_i32 = arith.constant 0 : i32
    %c0_i32_0 = arith.constant 0 : i32
    %c0_i32_1 = arith.constant 0 : i32
    return %c0_i32, %c0_i32_0 : i32, i32
  }
  func.func @transform_6(%arg0: i32) -> (i32, i32, i32) {
    %c0_i32 = arith.constant 0 : i32
    %c0_i32_0 = arith.constant 0 : i32
    %c0_i32_1 = arith.constant 0 : i32
    return %arg0, %c0_i32, %c0_i32_0 : i32, i32, i32
  }
}

</mosaic_0001>

<llo_original>
// kernel: basic_block_forward.1
$region0: #{basic_block_forward.1}
  #allocation0 [shape = 'u32[]', space=smem, size = 0x4, offset = 0x4, fixed_abs, tag = 'smem constant byte address 0x4 - core index']
  #allocation1 [shape = 'u32[144,128]{1,0:T(1,128)}', space=vmem, size = 0x12000, scoped, tag = 'internal scratch']
  #allocation2 [shape = 'f32[8,512]{1,0:T(8,128)}', space=vmem, size = 0x4000, scoped, tag = 'scratch operand']
  #allocation3 [shape = 'f32[8,512]{1,0:T(8,128)}', space=vmem, size = 0x4000, scoped, tag = 'scratch operand']
  %s0 = inlined_call_operand.vmem [shape: f32[2,8,256], index: 0, kind: input, shape index: {}]
  %s1 = inlined_call_operand.vmem [shape: f32[2,256], index: 1, kind: input, shape index: {}]
  %s2 = inlined_call_operand.vmem [shape: bf16[8,72], index: 2, kind: input, shape index: {}]
  %s3 = inlined_call_operand.vmem [shape: f32[8,1], index: 3, kind: input, shape index: {}]
  %s4 = inlined_call_operand.vmem [shape: bf16[8,72], index: 4, kind: input, shape index: {}]
  %s5 = inlined_call_operand.vmem [shape: f32[8,1], index: 5, kind: input, shape index: {}]
  %s6 = inlined_call_operand.vmem [shape: f32[2,4,256], index: 6, kind: output, shape index: {}]
  %s7 = sld [smem:[#allocation0]]
  $region57: #{basic_block_forward.1} parent=0
    _
  %s9 = ssub.s32 1, %s7
  %s10 = scalar_select 0, %s9, %s7
  loop: start=0, step=1, limit=4
  $region2: #{basic_block_forward.1} parent=0 // loop_pre_header
    _
  $region3: #{basic_block_forward.1} parent=0 // loop_header
    %s12 = sphi 0, %s16
    %p13 = scmp.ge.s32.totalorder %s12, 4
    %s22 = sphi 0, %s24
    %s25 = sphi 0, %s22
    %s26 = sphi 0, %s25
    %s42 = sphi 0, %s26
    %s46 = sphi 0, %s46
    %s48 = sphi 0, %s46
    %s49 = sphi 0, %s48
    %s63 = sphi 0, %s49
    %s67 = sphi 0, %s67
    %s69 = sphi 0, %s67
    %s70 = sphi 0, %s69
    %s84 = sphi 0, %s70
    %s88 = sphi 0, %s88
    %s90 = sphi 0, %s88
    %s91 = sphi 0, %s90
    %s105 = sphi 0, %s91
    %s109 = sphi 0, %s109
    %s111 = sphi 0, %s109
    %s112 = sphi 0, %s111
    %s126 = sphi 0, %s112
    %s130 = sphi 0, %s130
    %s132 = sphi 0, %s130
    %s133 = sphi 0, %s132
    %s147 = sphi 0, %s133
    %s153 = sphi 0, %s155
    %s156 = sphi 0, %s153
    %s157 = sphi 0, %s156
    %s173 = sphi 0, %s157
  $region4: #{basic_block_forward.1} parent=0 // loop_header_branch
    %15 = sbr.rel (%p13) target = $region8
  $region5: #{basic_block_forward.1} parent=0 // loop_body
    %s17 = ssub.s32 %s12, 1
    %s18 = ssub.s32 %s12, 2
    %s19 = sadd.s32 %s12, 1
    %s20 = ssub.s32 %s12, %s19
    %p21 = scmp.eq.s32.totalorder %s20, 0
    %s23 = sadd.s32 %s22, 1
    %s24 = scalar_select %p21, %s22, %s23
    %p27 = pneg %p21
    %p28 = scmp.eq.s32.totalorder %s12, 1
    %p29 = por %p27, %p28
    %p30 = scmp.ne.s32.totalorder %s22, %s25
    %p31 = scmp.eq.s32.totalorder %s12, 0
    %p32 = por %p30, %p31
    %p33 = scmp.ne.s32.totalorder %s22, %s25
    %p34 = scmp.eq.s32.totalorder %s17, 1
    %p35 = por %p33, %p34
    %p36 = scmp.ne.s32.totalorder %s25, %s26
    %p37 = scmp.eq.s32.totalorder %s17, 0
    %p38 = por %p36, %p37
    %p39 = scmp.ne.s32.totalorder %s25, %s26
    %p40 = scmp.eq.s32.totalorder %s18, 1
    %p41 = por %p39, %p40
    %p43 = scmp.ne.s32.totalorder %s26, %s42
    %p44 = scmp.eq.s32.totalorder %s18, 0
    %p45 = por %p43, %p44
    %s47 = sadd.s32 %s46, 1
    %p50 = scmp.eq.s32.totalorder %s12, 1
    %p51 = scmp.ne.s32.totalorder %s46, %s48
    %p52 = scmp.eq.s32.totalorder %s12, 0
    %p53 = por %p51, %p52
    %p54 = scmp.ne.s32.totalorder %s46, %s48
    %p55 = scmp.eq.s32.totalorder %s17, 1
    %p56 = por %p54, %p55
    %p57 = scmp.ne.s32.totalorder %s48, %s49
    %p58 = scmp.eq.s32.totalorder %s17, 0
    %p59 = por %p57, %p58
    %p60 = scmp.ne.s32.totalorder %s48, %s49
    %p61 = scmp.eq.s32.totalorder %s18, 1
    %p62 = por %p60, %p61
    %p64 = scmp.ne.s32.totalorder %s49, %s63
    %p65 = scmp.eq.s32.totalorder %s18, 0
    %p66 = por %p64, %p65
    %s68 = sadd.s32 %s67, 1
    %p71 = scmp.eq.s32.totalorder %s12, 1
    %p72 = scmp.ne.s32.totalorder %s67, %s69
    %p73 = scmp.eq.s32.totalorder %s12, 0
    %p74 = por %p72, %p73
    %p75 = scmp.ne.s32.totalorder %s67, %s69
    %p76 = scmp.eq.s32.totalorder %s17, 1
    %p77 = por %p75, %p76
    %p78 = scmp.ne.s32.totalorder %s69, %s70
    %p79 = scmp.eq.s32.totalorder %s17, 0
    %p80 = por %p78, %p79
    %p81 = scmp.ne.s32.totalorder %s69, %s70
    %p82 = scmp.eq.s32.totalorder %s18, 1
    %p83 = por %p81, %p82
    %p85 = scmp.ne.s32.totalorder %s70, %s84
    %p86 = scmp.eq.s32.totalorder %s18, 0
    %p87 = por %p85, %p86
    %s89 = sadd.s32 %s88, 1
    %p92 = scmp.eq.s32.totalorder %s12, 1
    %p93 = scmp.ne.s32.totalorder %s88, %s90
    %p94 = scmp.eq.s32.totalorder %s12, 0
    %p95 = por %p93, %p94
    %p96 = scmp.ne.s32.totalorder %s88, %s90
    %p97 = scmp.eq.s32.totalorder %s17, 1
    %p98 = por %p96, %p97
    %p99 = scmp.ne.s32.totalorder %s90, %s91
    %p100 = scmp.eq.s32.totalorder %s17, 0
    %p101 = por %p99, %p100
    %p102 = scmp.ne.s32.totalorder %s90, %s91
    %p103 = scmp.eq.s32.totalorder %s18, 1
    %p104 = por %p102, %p103
    %p106 = scmp.ne.s32.totalorder %s91, %s105
    %p107 = scmp.eq.s32.totalorder %s18, 0
    %p108 = por %p106, %p107
    %s110 = sadd.s32 %s109, 1
    %p113 = scmp.eq.s32.totalorder %s12, 1
    %p114 = scmp.ne.s32.totalorder %s109, %s111
    %p115 = scmp.eq.s32.totalorder %s12, 0
    %p116 = por %p114, %p115
    %p117 = scmp.ne.s32.totalorder %s109, %s111
    %p118 = scmp.eq.s32.totalorder %s17, 1
    %p119 = por %p117, %p118
    %p120 = scmp.ne.s32.totalorder %s111, %s112
    %p121 = scmp.eq.s32.totalorder %s17, 0
    %p122 = por %p120, %p121
    %p123 = scmp.ne.s32.totalorder %s111, %s112
    %p124 = scmp.eq.s32.totalorder %s18, 1
    %p125 = por %p123, %p124
    %p127 = scmp.ne.s32.totalorder %s112, %s126
    %p128 = scmp.eq.s32.totalorder %s18, 0
    %p129 = por %p127, %p128
    %s131 = sadd.s32 %s130, 1
    %p134 = scmp.eq.s32.totalorder %s12, 1
    %p135 = scmp.ne.s32.totalorder %s130, %s132
    %p136 = scmp.eq.s32.totalorder %s12, 0
    %p137 = por %p135, %p136
    %p138 = scmp.ne.s32.totalorder %s130, %s132
    %p139 = scmp.eq.s32.totalorder %s17, 1
    %p140 = por %p138, %p139
    %p141 = scmp.ne.s32.totalorder %s132, %s133
    %p142 = scmp.eq.s32.totalorder %s17, 0
    %p143 = por %p141, %p142
    %p144 = scmp.ne.s32.totalorder %s132, %s133
    %p145 = scmp.eq.s32.totalorder %s18, 1
    %p146 = por %p144, %p145
    %p148 = scmp.ne.s32.totalorder %s133, %s147
    %p149 = scmp.eq.s32.totalorder %s18, 0
    %p150 = por %p148, %p149
    %s151 = ssub.s32 %s12, %s19
    %p152 = scmp.eq.s32.totalorder %s151, 0
    %s154 = sadd.s32 %s153, 1
    %s155 = scalar_select %p152, %s153, %s154
    %p158 = pneg %p152
    %p159 = scmp.eq.s32.totalorder %s12, 1
    %p160 = por %p158, %p159
    %p161 = scmp.ne.s32.totalorder %s153, %s156
    %p162 = scmp.eq.s32.totalorder %s12, 0
    %p163 = por %p161, %p162
    %p164 = scmp.ne.s32.totalorder %s153, %s156
    %p165 = scmp.eq.s32.totalorder %s17, 1
    %p166 = por %p164, %p165
    %p167 = scmp.ne.s32.totalorder %s156, %s157
    %p168 = scmp.eq.s32.totalorder %s17, 0
    %p169 = por %p167, %p168
    %p170 = scmp.ne.s32.totalorder %s156, %s157
    %p171 = scmp.eq.s32.totalorder %s18, 1
    %p172 = por %p170, %p171
    %p174 = scmp.ne.s32.totalorder %s157, %s173
    %p175 = scmp.eq.s32.totalorder %s18, 0
    %p176 = por %p174, %p175
    %p177 = scmp.le.s32.totalorder 1, %s12
    %p178 = scmp.lt.s32.totalorder %s12, 3
    %p179 = pnand %p177, %p178
    %p180 = pneg %p179
    // Predicated region
    $region9: #{basic_block_forward.1} parent=5 // pred_check
      _
    $region10: #{basic_block_forward.1} parent=5 // pred_check_branch
      %182 = sbr.rel (%p179) target = $region12
    $region11: #{basic_block_forward.1} parent=5 // pred_region
      %s183 = ssub.s32 %s12, 1
      // Predicated region
      $region13: #{basic_block_forward.1} parent=11 // pred_check
        %p184 = pneg %p59
      $region14: #{basic_block_forward.1} parent=11 // pred_check_branch
        %186 = sbr.rel (%p184) target = $region16
      $region15: #{basic_block_forward.1} parent=11 // pred_region
        _
      $region16: #{basic_block_forward.1} parent=11 // pred_fallthru
        _
      // Predicated region
      $region17: #{basic_block_forward.1} parent=11 // pred_check
        %p187 = pneg %p80
      $region18: #{basic_block_forward.1} parent=11 // pred_check_branch
        %189 = sbr.rel (%p187) target = $region20
      $region19: #{basic_block_forward.1} parent=11 // pred_region
        _
      $region20: #{basic_block_forward.1} parent=11 // pred_fallthru
        _
      // Predicated region
      $region21: #{basic_block_forward.1} parent=11 // pred_check
        %p190 = pneg %p101
      $region22: #{basic_block_forward.1} parent=11 // pred_check_branch
        %192 = sbr.rel (%p190) target = $region24
      $region23: #{basic_block_forward.1} parent=11 // pred_region
        _
      $region24: #{basic_block_forward.1} parent=11 // pred_fallthru
        _
      // Predicated region
      $region25: #{basic_block_forward.1} parent=11 // pred_check
        %p193 = pneg %p122
      $region26: #{basic_block_forward.1} parent=11 // pred_check_branch
        %195 = sbr.rel (%p193) target = $region28
      $region27: #{basic_block_forward.1} parent=11 // pred_region
        _
      $region28: #{basic_block_forward.1} parent=11 // pred_fallthru
        _
      // Predicated region
      $region29: #{basic_block_forward.1} parent=11 // pred_check
        %p196 = pneg %p143
      $region30: #{basic_block_forward.1} parent=11 // pred_check_branch
        %198 = sbr.rel (%p196) target = $region32
      $region31: #{basic_block_forward.1} parent=11 // pred_region
        _
      $region32: #{basic_block_forward.1} parent=11 // pred_fallthru
        _
    $region12: #{basic_block_forward.1} parent=5 // pred_fallthru
      _
    %p199 = scmp.lt.s32.totalorder %s12, 2
    // Predicated region
    $region33: #{basic_block_forward.1} parent=5 // pred_check
      %p200 = pneg %p199
    $region34: #{basic_block_forward.1} parent=5 // pred_check_branch
      %202 = sbr.rel (%p200) target = $region36
    $region35: #{basic_block_forward.1} parent=5 // pred_region
      // Predicated region
      $region37: #{basic_block_forward.1} parent=35 // pred_check
        %p203 = pneg %p32
      $region38: #{basic_block_forward.1} parent=35 // pred_check_branch
        %205 = sbr.rel (%p203) target = $region40
      $region39: #{basic_block_forward.1} parent=35 // pred_region
        %p206 = scmp.lt.s32.totalorder %s12, 1
        %s207 = scalar_select %p206, %s12, 1
        %s208 = smul.addr %s207, 2
        %s209 = smul.addr %s208, 8
        %s210 = scalar_lea.vmem %s0, %s209
      $region40: #{basic_block_forward.1} parent=35 // pred_fallthru
        _
    $region36: #{basic_block_forward.1} parent=5 // pred_fallthru
      _
    %p211 = scmp.le.s32.totalorder 1, %s12
    %p212 = scmp.lt.s32.totalorder %s12, 3
    %p213 = pnand %p211, %p212
    %p214 = pneg %p213
    // Predicated region
    $region41: #{basic_block_forward.1} parent=5 // pred_check
      _
    $region42: #{basic_block_forward.1} parent=5 // pred_check_branch
      %216 = sbr.rel (%p213) target = $region44
    $region43: #{basic_block_forward.1} parent=5 // pred_region
      %s217 = ssub.s32 %s12, 1
      %p218 = scmp.lt.s32.totalorder %s17, 1
      %s219 = scalar_select %p218, %s17, 1
      %s220 = smul.addr %s219, 2
      %s221 = smul.addr %s220, 8
      %s222 = scalar_lea.vmem %s0, %s221
      %p223 = pneg %p38
      %p224 = pneg %p35
      %p225 = pneg %p59
      %p226 = pneg %p56
      %p227 = pneg %p80
      %p228 = pneg %p77
      %p229 = pneg %p101
      %p230 = pneg %p98
      %p231 = pneg %p122
      %p232 = pneg %p119
      %p233 = pneg %p143
      %p234 = pneg %p140
      %p235 = pneg %p169
      %p236 = pneg %p166
      %p237 = scmp.lt.s32.totalorder %s17, 1
      %s238 = scalar_select %p237, %s17, 1
      %s239 = smul.addr %s238, 2
      %s240 = smul.addr %s239, 4
      %s241 = scalar_lea.vmem %s6, %s240
      %p242 = scmp.lt.s32.totalorder %s17, 1
      %s243 = scalar_select %p242, %s17, 1
      %s244 = smul.addr %s243, 2
      %s245 = smul.addr %s244, 8
      %s246 = scalar_lea.vmem %s0, %s245
      %p247 = scmp.lt.s32.totalorder %s17, 1
      %s248 = scalar_select %p247, %s17, 1
      %s249 = smul.addr %s248, 2
      %s250 = smul.addr %s249, 4
      %s251 = scalar_lea.vmem %s6, %s250
      %v253 = vld [vmem:[%s246] sm:$0xff]
      %v254 = vld [vmem:[%s246 + $0x8] sm:$0xff]
      %255 = vst [vmem:[#allocation2] sm:$0xff] 0.0
      %256 = vst [vmem:[#allocation2 + $0x18] sm:$0xff] 0.0
      %257 = vst [vmem:[#allocation3] sm:$0xff] 0.0
      %258 = vst [vmem:[#allocation3 + $0x18] sm:$0xff] 0.0
      %259 = vst [vmem:[#allocation2 + $0x8] sm:$0xff] %v253
      %260 = vst [vmem:[#allocation2 + $0x10] sm:$0xff] %v254
      %v261 = vld [vmem:[%s1] ss:$2 sm:$0x3]
      %s262 = scalar_lea.vmem %s1, 1
      %v263 = vld [vmem:[%s262] ss:$2 sm:$0x3]
      %v264 = vld [vmem:[%s2] sm:$0xf]
      %v265 = vld [vmem:[#allocation2] sm:$0xff]
      %v266 = vld [vmem:[#allocation2 + $0x8] sm:$0xff]
      %v267 = vld [vmem:[#allocation2 + $0x10] sm:$0xff]
      %v269 = vlaneseq
      %v270 = vshrl.u32 %v269, 7
      %v271 = vsub.s32 0, %v270
      %v272 = vrot.slane %v261, %v271
      %v273 = vlaneseq
      %v274 = vshrl.u32 %v273, 7
      %v275 = vsub.s32 1, %v274
      %v276 = vrot.slane %v261, %v275
      %277 = vrot.lane.b32.xlu0 %v272, 111
      %v278 = vpop.permute.xlu0 %277
      %279 = vrot.lane.b32.xlu0 %v276, 111
      %v280 = vpop.permute.xlu0 %279
      %vm281 = vcmask 908288
      %v282 = vsel %vm281, %v278, %v280
      %v286 = vmul.f32 %v265, %v278
      %v287 = vmul.f32 %v266, %v282
      %v288 = vmul.f32 %v267, %v280
      %v290 = vlaneseq
      %v291 = vshrl.u32 %v290, 7
      %v292 = vsub.s32 0, %v291
      %v293 = vrot.slane %v263, %v292
      %v294 = vlaneseq
      %v295 = vshrl.u32 %v294, 7
      %v296 = vsub.s32 1, %v295
      %v297 = vrot.slane %v263, %v296
      %298 = vrot.lane.b32.xlu0 %v293, 113
      %v299 = vpop.permute.xlu0 %298
      %300 = vrot.lane.b32.xlu0 %v297, 113
      %v301 = vpop.permute.xlu0 %300
      %vm302 = vcmask 924672
      %v303 = vsel %vm302, %v299, %v301
      %v307 = vmul.f32 %v265, %v299
      %v308 = vmul.f32 %v266, %v303
      %v309 = vmul.f32 %v267, %v301
      %310 = vrot.lane.b32.xlu0 %v272, 127
      %v311 = vpop.permute.xlu0 %310
      %312 = vrot.lane.b32.xlu0 %v276, 127
      %v313 = vpop.permute.xlu0 %312
      %vm314 = vcmask 1039360
      %v315 = vsel %vm314, %v311, %v313
      %v319 = vmul.f32 %v265, %v311
      %v320 = vmul.f32 %v266, %v315
      %v321 = vmul.f32 %v267, %v313
      %v322 = vld [vmem:[#allocation2 + $0x8] sm:$0xff]
      %v323 = vld [vmem:[#allocation2 + $0x10] sm:$0xff]
      %v324 = vld [vmem:[#allocation2 + $0x18] sm:$0xff]
      %325 = vrot.lane.b32.xlu0 %v293, 1
      %v326 = vpop.permute.xlu0 %325
      %327 = vrot.lane.b32.xlu0 %v297, 1
      %v328 = vpop.permute.xlu0 %327
      %vm329 = vcmask 7168
      %v330 = vsel %vm329, %v326, %v328
      %v334 = vmul.f32 %v322, %v326
      %v335 = vmul.f32 %v323, %v330
      %v336 = vmul.f32 %v324, %v328
      %337 = vrot.lane.b32.xlu0 %v272, 15
      %v338 = vpop.permute.xlu0 %337
      %339 = vrot.lane.b32.xlu0 %v276, 15
      %v340 = vpop.permute.xlu0 %339
      %vm341 = vcmask 121856
      %v342 = vsel %vm341, %v338, %v340
      %v346 = vmul.f32 %v322, %v338
      %v347 = vmul.f32 %v323, %v342
      %v348 = vmul.f32 %v324, %v340
      %349 = vrot.lane.b32.xlu0 %v293, 17
      %v350 = vpop.permute.xlu0 %349
      %351 = vrot.lane.b32.xlu0 %v297, 17
      %v352 = vpop.permute.xlu0 %351
      %vm353 = vcmask 138240
      %v354 = vsel %vm353, %v350, %v352
      %v358 = vmul.f32 %v322, %v350
      %v359 = vmul.f32 %v323, %v354
      %v360 = vmul.f32 %v324, %v352
      %364 = vrot.lane.b32.xlu0 %v265, 127
      %v365 = vpop.permute.xlu0 %364
      %366 = vrot.lane.b32.xlu0 %v266, 127
      %v367 = vpop.permute.xlu0 %366
      %368 = vrot.lane.b32.xlu0 %v267, 127
      %v369 = vpop.permute.xlu0 %368
      %v370 = vsel %vm314, %v365, %v367
      %v371 = vsel %vm314, %v367, %v369
      %378 = vrot.lane.b32.xlu0 %v307, 126
      %v379 = vpop.permute.xlu0 %378
      %380 = vrot.lane.b32.xlu0 %v308, 126
      %v381 = vpop.permute.xlu0 %380
      %382 = vrot.lane.b32.xlu0 %v309, 126
      %v383 = vpop.permute.xlu0 %382
      %vm384 = vcmask 1031168
      %v385 = vsel %vm384, %v379, %v381
      %v386 = vsel %vm384, %v381, %v383
      %393 = vrot.lane.b32.xlu0 %v319, 112
      %v394 = vpop.permute.xlu0 %393
      %395 = vrot.lane.b32.xlu0 %v320, 112
      %v396 = vpop.permute.xlu0 %395
      %397 = vrot.lane.b32.xlu0 %v321, 112
      %v398 = vpop.permute.xlu0 %397
      %vm399 = vcmask 916480
      %v400 = vsel %vm399, %v394, %v396
      %v401 = vsel %vm399, %v396, %v398
      %405 = vrot.lane.b32.xlu0 %v266, 111
      %v406 = vpop.permute.xlu0 %405
      %407 = vrot.lane.b32.xlu0 %v267, 111
      %v408 = vpop.permute.xlu0 %407
      %v409 = vsel %vm281, %v406, %v408
      %416 = vrot.lane.b32.xlu0 %v334, 110
      %v417 = vpop.permute.xlu0 %416
      %418 = vrot.lane.b32.xlu0 %v335, 110
      %v419 = vpop.permute.xlu0 %418
      %420 = vrot.lane.b32.xlu0 %v336, 110
      %v421 = vpop.permute.xlu0 %420
      %vm422 = vcmask 900096
      %v423 = vsel %vm422, %v417, %v419
      %v424 = vsel %vm422, %v419, %v421
      %431 = vrot.lane.b32.xlu0 %v346, 96
      %v432 = vpop.permute.xlu0 %431
      %433 = vrot.lane.b32.xlu0 %v347, 96
      %v434 = vpop.permute.xlu0 %433
      %435 = vrot.lane.b32.xlu0 %v348, 96
      %v436 = vpop.permute.xlu0 %435
      %vm437 = vcmask 785408
      %v438 = vsel %vm437, %v432, %v434
      %v439 = vsel %vm437, %v434, %v436
      %446 = vrot.lane.b32.xlu0 %v322, 95
      %v447 = vpop.permute.xlu0 %446
      %448 = vrot.lane.b32.xlu0 %v323, 95
      %v449 = vpop.permute.xlu0 %448
      %450 = vrot.lane.b32.xlu0 %v324, 95
      %v451 = vpop.permute.xlu0 %450
      %vm452 = vcmask 777216
      %v453 = vsel %vm452, %v447, %v449
      %v454 = vsel %vm452, %v449, %v451
      %461 = vrot.lane.b32.xlu0 %v358, 94
      %v462 = vpop.permute.xlu0 %461
      %463 = vrot.lane.b32.xlu0 %v359, 94
      %v464 = vpop.permute.xlu0 %463
      %465 = vrot.lane.b32.xlu0 %v360, 94
      %v466 = vpop.permute.xlu0 %465
      %vm467 = vcmask 769024
      %v468 = vsel %vm467, %v462, %v464
      %v469 = vsel %vm467, %v464, %v466
      %v473 = vpack.c.bf16 %v370, %v286
      %v474 = vpack.c.bf16 %v371, %v287
      %v475 = vpack.c.bf16 %v369, %v288
      %v476 = vpack.c.bf16 %v400, %v385
      %v477 = vpack.c.bf16 %v401, %v386
      %v478 = vpack.c.bf16 %v398, %v383
      %v479 = vpack.c.bf16 %v417, %v406
      %v480 = vpack.c.bf16 %v423, %v409
      %v481 = vpack.c.bf16 %v424, %v408
      %v482 = vpack.c.bf16 %v447, %v432
      %v483 = vpack.c.bf16 %v453, %v438
      %v484 = vpack.c.bf16 %v454, %v439
      %v485 = vpack.c.bf16 %v462, %v462
      %v486 = vpack.c.bf16 %v468, %v468
      %v487 = vpack.c.bf16 %v469, %v469
      %v488 = vld [vmem:[%s3] sm:$0xff]
      %490 = vset.pattern.permute.xlu0 0
      %491 = vperm.xlu0 %490, %v488
      %v492 = vpop.permute.xlu0 %491
      %509 = vrot.lane.b32.xlu0 %v473, 17
      %v510 = vpop.permute.xlu0 %509
      %511 = vrot.lane.b32.xlu0 %v474, 17
      %v512 = vpop.permute.xlu0 %511
      %513 = vrot.lane.b32.xlu0 %v475, 17
      %v514 = vpop.permute.xlu0 %513
      %515 = vrot.lane.b32.xlu0 %v476, 17
      %v516 = vpop.permute.xlu0 %515
      %517 = vrot.lane.b32.xlu0 %v477, 17
      %v518 = vpop.permute.xlu0 %517
      %519 = vrot.lane.b32.xlu0 %v478, 17
      %v520 = vpop.permute.xlu0 %519
      %521 = vrot.lane.b32.xlu0 %v479, 17
      %v522 = vpop.permute.xlu0 %521
      %523 = vrot.lane.b32.xlu0 %v480, 17
      %v524 = vpop.permute.xlu0 %523
      %525 = vrot.lane.b32.xlu0 %v481, 17
      %v526 = vpop.permute.xlu0 %525
      %527 = vrot.lane.b32.xlu0 %v482, 17
      %v528 = vpop.permute.xlu0 %527
      %529 = vrot.lane.b32.xlu0 %v483, 17
      %v530 = vpop.permute.xlu0 %529
      %531 = vrot.lane.b32.xlu0 %v484, 17
      %v532 = vpop.permute.xlu0 %531
      %533 = vrot.lane.b32.xlu0 %v485, 17
      %v534 = vpop.permute.xlu0 %533
      %535 = vrot.lane.b32.xlu0 %v486, 17
      %v536 = vpop.permute.xlu0 %535
      %537 = vrot.lane.b32.xlu0 %v487, 17
      %v538 = vpop.permute.xlu0 %537
      %vm539 = vcmask 138240
      %v540 = vsel %vm539, %v510, %v512
      %v541 = vsel %vm539, %v512, %v514
      %v542 = vsel %vm539, %v516, %v518
      %v543 = vsel %vm539, %v518, %v520
      %v544 = vsel %vm539, %v522, %v524
      %v545 = vsel %vm539, %v524, %v526
      %v546 = vsel %vm539, %v528, %v530
      %v547 = vsel %vm539, %v530, %v532
      %v548 = vsel %vm539, %v534, %v536
      %v549 = vsel %vm539, %v536, %v538
      %vm558 = vcmask 588800
      %v560 = vsel %vm558, %v264, 0
      %vm562 = vcmask 1043456
      %v564 = vsel %vm562, %v548, 0
      %v567 = vsel %vm562, %v549, 0
      %569 = vmatprep.subr.bf16.mxu0 %v541
      %570 = vmatpush1.bf16.msra.mxu0 %v540
      %571 = vmatprep.subr.bf16.mxu0 %v543
      %572 = vmatpush1.bf16.msra.mxu0 %v542
      %573 = vmatprep.subr.bf16.mxu0 %v545
      %574 = vmatpush1.bf16.msra.mxu0 %v544
      %575 = vmatprep.subr.bf16.mxu0 %v547
      %576 = vmatpush1.bf16.msra.mxu0 %v546
      %577 = vmatprep.subr.bf16.mxu0 %v567
      %578 = vmatpush1.bf16.msra.mxu0 %v564
      %579 = vmatprep.subr.bf16.mxu0 0
      %580 = vmatpush1.bf16.msra.mxu0 0
      %581 = vmatprep.subr.bf16.mxu0 0
      %582 = vmatpush1.bf16.msra.mxu0 0
      %583 = vmatprep.subr.bf16.mxu0 0
      %584 = vmatpush1.bf16.msra.mxu0 0
      %585 = vmatprep.subr.bf16.mxu0 0
      %586 = vmatpush1.bf16.msra.mxu0 0
      %587 = vmatprep.subr.bf16.mxu0 0
      %588 = vmatpush1.bf16.msra.mxu0 0
      %589 = vmatprep.subr.bf16.mxu0 0
      %590 = vmatpush1.bf16.msra.mxu0 0
      %591 = vmatprep.subr.bf16.mxu0 0
      %592 = vmatpush1.bf16.msra.mxu0 0
      %593 = vmatprep.subr.bf16.mxu0 0
      %594 = vmatpush1.bf16.msra.mxu0 0
      %595 = vmatprep.subr.bf16.mxu0 0
      %596 = vmatpush1.bf16.msra.mxu0 0
      %597 = vmatprep.subr.bf16.mxu0 0
      %598 = vmatpush1.bf16.msra.mxu0 0
      %599 = vmatprep.subr.bf16.mxu0 0
      %600 = vmatpush1.bf16.msra.mxu0 0
      %601 = vmatprep.mubr.bf16.mxu0 0
      %602 = vmatmul.mubr.bf16.gmra.mrb[0].mxu0 %v560
      %v603 = vpop.f32.mrb[0].mxu0
      %v604 = vadd.f32 %v492, %v603
      %v605 = vpop.f32.mrb[0].mxu0
      %v606 = vadd.f32 %v492, %v605
      %v607 = vpop.f32.mrb[0].mxu0
      %v608 = vpop.f32.mrb[0].mxu0
      %609 = vdwg.mxu0
      %v610 = vmax.f32 %v604, 0.0
      %v611 = vmax.f32 %v606, 0.0
      %612 = vst [vmem:[#allocation3 + $0x8] sm:$0xff] %v610
      %613 = vst [vmem:[#allocation3 + $0x10] sm:$0xff] %v611
      %v614 = vld [vmem:[%s4] sm:$0xf]
      %v615 = vld [vmem:[#allocation3] sm:$0xff]
      %v616 = vld [vmem:[#allocation3 + $0x8] sm:$0xff]
      %v617 = vld [vmem:[#allocation3 + $0x10] sm:$0xff]
      %v618 = vmul.f32 %v615, %v278
      %v619 = vmul.f32 %v616, %v282
      %v620 = vmul.f32 %v617, %v280
      %v621 = vmul.f32 %v615, %v299
      %v622 = vmul.f32 %v616, %v303
      %v623 = vmul.f32 %v617, %v301
      %v624 = vmul.f32 %v615, %v311
      %v625 = vmul.f32 %v616, %v315
      %v626 = vmul.f32 %v617, %v313
      %v627 = vld [vmem:[#allocation3 + $0x8] sm:$0xff]
      %v628 = vld [vmem:[#allocation3 + $0x10] sm:$0xff]
      %v629 = vld [vmem:[#allocation3 + $0x18] sm:$0xff]
      %v630 = vmul.f32 %v627, %v326
      %v631 = vmul.f32 %v628, %v330
      %v632 = vmul.f32 %v629, %v328
      %v633 = vmul.f32 %v627, %v338
      %v634 = vmul.f32 %v628, %v342
      %v635 = vmul.f32 %v629, %v340
      %v636 = vmul.f32 %v627, %v350
      %v637 = vmul.f32 %v628, %v354
      %v638 = vmul.f32 %v629, %v352
      %642 = vrot.lane.b32.xlu0 %v615, 127
      %v643 = vpop.permute.xlu0 %642
      %644 = vrot.lane.b32.xlu0 %v616, 127
      %v645 = vpop.permute.xlu0 %644
      %646 = vrot.lane.b32.xlu0 %v617, 127
      %v647 = vpop.permute.xlu0 %646
      %v648 = vsel %vm314, %v643, %v645
      %v649 = vsel %vm314, %v645, %v647
      %656 = vrot.lane.b32.xlu0 %v621, 126
      %v657 = vpop.permute.xlu0 %656
      %658 = vrot.lane.b32.xlu0 %v622, 126
      %v659 = vpop.permute.xlu0 %658
      %660 = vrot.lane.b32.xlu0 %v623, 126
      %v661 = vpop.permute.xlu0 %660
      %v662 = vsel %vm384, %v657, %v659
      %v663 = vsel %vm384, %v659, %v661
      %670 = vrot.lane.b32.xlu0 %v624, 112
      %v671 = vpop.permute.xlu0 %670
      %672 = vrot.lane.b32.xlu0 %v625, 112
      %v673 = vpop.permute.xlu0 %672
      %674 = vrot.lane.b32.xlu0 %v626, 112
      %v675 = vpop.permute.xlu0 %674
      %v676 = vsel %vm399, %v671, %v673
      %v677 = vsel %vm399, %v673, %v675
      %681 = vrot.lane.b32.xlu0 %v616, 111
      %v682 = vpop.permute.xlu0 %681
      %683 = vrot.lane.b32.xlu0 %v617, 111
      %v684 = vpop.permute.xlu0 %683
      %v685 = vsel %vm281, %v682, %v684
      %692 = vrot.lane.b32.xlu0 %v630, 110
      %v693 = vpop.permute.xlu0 %692
      %694 = vrot.lane.b32.xlu0 %v631, 110
      %v695 = vpop.permute.xlu0 %694
      %696 = vrot.lane.b32.xlu0 %v632, 110
      %v697 = vpop.permute.xlu0 %696
      %v698 = vsel %vm422, %v693, %v695
      %v699 = vsel %vm422, %v695, %v697
      %706 = vrot.lane.b32.xlu0 %v633, 96
      %v707 = vpop.permute.xlu0 %706
      %708 = vrot.lane.b32.xlu0 %v634, 96
      %v709 = vpop.permute.xlu0 %708
      %710 = vrot.lane.b32.xlu0 %v635, 96
      %v711 = vpop.permute.xlu0 %710
      %v712 = vsel %vm437, %v707, %v709
      %v713 = vsel %vm437, %v709, %v711
      %720 = vrot.lane.b32.xlu0 %v627, 95
      %v721 = vpop.permute.xlu0 %720
      %722 = vrot.lane.b32.xlu0 %v628, 95
      %v723 = vpop.permute.xlu0 %722
      %724 = vrot.lane.b32.xlu0 %v629, 95
      %v725 = vpop.permute.xlu0 %724
      %v726 = vsel %vm452, %v721, %v723
      %v727 = vsel %vm452, %v723, %v725
      %734 = vrot.lane.b32.xlu0 %v636, 94
      %v735 = vpop.permute.xlu0 %734
      %736 = vrot.lane.b32.xlu0 %v637, 94
      %v737 = vpop.permute.xlu0 %736
      %738 = vrot.lane.b32.xlu0 %v638, 94
      %v739 = vpop.permute.xlu0 %738
      %v740 = vsel %vm467, %v735, %v737
      %v741 = vsel %vm467, %v737, %v739
      %v745 = vpack.c.bf16 %v648, %v618
      %v746 = vpack.c.bf16 %v649, %v619
      %v747 = vpack.c.bf16 %v647, %v620
      %v748 = vpack.c.bf16 %v676, %v662
      %v749 = vpack.c.bf16 %v677, %v663
      %v750 = vpack.c.bf16 %v675, %v661
      %v751 = vpack.c.bf16 %v693, %v682
      %v752 = vpack.c.bf16 %v698, %v685
      %v753 = vpack.c.bf16 %v699, %v684
      %v754 = vpack.c.bf16 %v721, %v707
      %v755 = vpack.c.bf16 %v726, %v712
      %v756 = vpack.c.bf16 %v727, %v713
      %v757 = vpack.c.bf16 %v735, %v735
      %v758 = vpack.c.bf16 %v740, %v740
      %v759 = vpack.c.bf16 %v741, %v741
      %v760 = vld [vmem:[%s5] sm:$0xff]
      %762 = vset.pattern.permute.xlu0 0
      %763 = vperm.xlu0 %762, %v760
      %v764 = vpop.permute.xlu0 %763
      %781 = vrot.lane.b32.xlu0 %v745, 17
      %v782 = vpop.permute.xlu0 %781
      %783 = vrot.lane.b32.xlu0 %v746, 17
      %v784 = vpop.permute.xlu0 %783
      %785 = vrot.lane.b32.xlu0 %v747, 17
      %v786 = vpop.permute.xlu0 %785
      %787 = vrot.lane.b32.xlu0 %v748, 17
      %v788 = vpop.permute.xlu0 %787
      %789 = vrot.lane.b32.xlu0 %v749, 17
      %v790 = vpop.permute.xlu0 %789
      %791 = vrot.lane.b32.xlu0 %v750, 17
      %v792 = vpop.permute.xlu0 %791
      %793 = vrot.lane.b32.xlu0 %v751, 17
      %v794 = vpop.permute.xlu0 %793
      %795 = vrot.lane.b32.xlu0 %v752, 17
      %v796 = vpop.permute.xlu0 %795
      %797 = vrot.lane.b32.xlu0 %v753, 17
      %v798 = vpop.permute.xlu0 %797
      %799 = vrot.lane.b32.xlu0 %v754, 17
      %v800 = vpop.permute.xlu0 %799
      %801 = vrot.lane.b32.xlu0 %v755, 17
      %v802 = vpop.permute.xlu0 %801
      %803 = vrot.lane.b32.xlu0 %v756, 17
      %v804 = vpop.permute.xlu0 %803
      %805 = vrot.lane.b32.xlu0 %v757, 17
      %v806 = vpop.permute.xlu0 %805
      %807 = vrot.lane.b32.xlu0 %v758, 17
      %v808 = vpop.permute.xlu0 %807
      %809 = vrot.lane.b32.xlu0 %v759, 17
      %v810 = vpop.permute.xlu0 %809
      %v811 = vsel %vm539, %v782, %v784
      %v812 = vsel %vm539, %v784, %v786
      %v813 = vsel %vm539, %v788, %v790
      %v814 = vsel %vm539, %v790, %v792
      %v815 = vsel %vm539, %v794, %v796
      %v816 = vsel %vm539, %v796, %v798
      %v817 = vsel %vm539, %v800, %v802
      %v818 = vsel %vm539, %v802, %v804
      %v819 = vsel %vm539, %v806, %v808
      %v820 = vsel %vm539, %v808, %v810
      %v830 = vsel %vm558, %v614, 0
      %v833 = vsel %vm562, %v819, 0
      %v836 = vsel %vm562, %v820, 0
      %838 = vmatprep.subr.bf16.mxu0 %v812
      %839 = vmatpush1.bf16.msra.mxu0 %v811
      %840 = vmatprep.subr.bf16.mxu0 %v814
      %841 = vmatpush1.bf16.msra.mxu0 %v813
      %842 = vmatprep.subr.bf16.mxu0 %v816
      %843 = vmatpush1.bf16.msra.mxu0 %v815
      %844 = vmatprep.subr.bf16.mxu0 %v818
      %845 = vmatpush1.bf16.msra.mxu0 %v817
      %846 = vmatprep.subr.bf16.mxu0 %v836
      %847 = vmatpush1.bf16.msra.mxu0 %v833
      %848 = vmatprep.subr.bf16.mxu0 0
      %849 = vmatpush1.bf16.msra.mxu0 0
      %850 = vmatprep.subr.bf16.mxu0 0
      %851 = vmatpush1.bf16.msra.mxu0 0
      %852 = vmatprep.subr.bf16.mxu0 0
      %853 = vmatpush1.bf16.msra.mxu0 0
      %854 = vmatprep.subr.bf16.mxu0 0
      %855 = vmatpush1.bf16.msra.mxu0 0
      %856 = vmatprep.subr.bf16.mxu0 0
      %857 = vmatpush1.bf16.msra.mxu0 0
      %858 = vmatprep.subr.bf16.mxu0 0
      %859 = vmatpush1.bf16.msra.mxu0 0
      %860 = vmatprep.subr.bf16.mxu0 0
      %861 = vmatpush1.bf16.msra.mxu0 0
      %862 = vmatprep.subr.bf16.mxu0 0
      %863 = vmatpush1.bf16.msra.mxu0 0
      %864 = vmatprep.subr.bf16.mxu0 0
      %865 = vmatpush1.bf16.msra.mxu0 0
      %866 = vmatprep.subr.bf16.mxu0 0
      %867 = vmatpush1.bf16.msra.mxu0 0
      %868 = vmatprep.subr.bf16.mxu0 0
      %869 = vmatpush1.bf16.msra.mxu0 0
      %870 = vmatprep.mubr.bf16.mxu0 0
      %871 = vmatmul.mubr.bf16.gmra.mrb[0].mxu0 %v830
      %v872 = vpop.f32.mrb[0].mxu0
      %v873 = vadd.f32 %v764, %v872
      %v874 = vpop.f32.mrb[0].mxu0
      %v875 = vadd.f32 %v764, %v874
      %v876 = vpop.f32.mrb[0].mxu0
      %v877 = vpop.f32.mrb[0].mxu0
      %878 = vdwg.mxu0
      %v879 = vadd.f32 %v873, %v253
      %v880 = vadd.f32 %v875, %v254
      %v881 = vmax.f32 %v879, 0.0
      %v882 = vmax.f32 %v880, 0.0
      %v885 = vcombine.low %v881, %v882
      %887 = vst [vmem:[%s251] sm:$0xff] %v885
      %p888 = scmp.lt.s32.totalorder %s17, 1
      %s889 = scalar_select %p888, %s17, 1
      %s890 = smul.addr %s889, 2
      %s891 = smul.addr %s890, 4
      %s892 = scalar_lea.vmem %s6, %s891
      // Predicated region
      $region45: #{basic_block_forward.1} parent=43 // pred_check
        %p893 = pneg %p166
      $region46: #{basic_block_forward.1} parent=43 // pred_check_branch
        %895 = sbr.rel (%p893) target = $region48
      $region47: #{basic_block_forward.1} parent=43 // pred_region
        _
      $region48: #{basic_block_forward.1} parent=43 // pred_fallthru
        _
    $region44: #{basic_block_forward.1} parent=5 // pred_fallthru
      _
    %p896 = scmp.le.s32.totalorder 2, %s12
    // Predicated region
    $region49: #{basic_block_forward.1} parent=5 // pred_check
      %p897 = pneg %p896
    $region50: #{basic_block_forward.1} parent=5 // pred_check_branch
      %899 = sbr.rel (%p897) target = $region52
    $region51: #{basic_block_forward.1} parent=5 // pred_region
      %s900 = ssub.s32 %s12, 2
      // Predicated region
      $region53: #{basic_block_forward.1} parent=51 // pred_check
        %p901 = pneg %p172
      $region54: #{basic_block_forward.1} parent=51 // pred_check_branch
        %903 = sbr.rel (%p901) target = $region56
      $region55: #{basic_block_forward.1} parent=51 // pred_region
        %p904 = scmp.lt.s32.totalorder %s18, 1
        %s905 = scalar_select %p904, %s18, 1
        %s906 = smul.addr %s905, 2
        %s907 = smul.addr %s906, 4
        %s908 = scalar_lea.vmem %s6, %s907
      $region56: #{basic_block_forward.1} parent=51 // pred_fallthru
        _
    $region52: #{basic_block_forward.1} parent=5 // pred_fallthru
      _
  $region6: #{basic_block_forward.1} parent=0 // loop_footer
    %s16 = sadd.s32 1, %s12
  $region7: #{basic_block_forward.1} parent=0 // loop_footer_branch
    %11 = sbr.rel target = $region3
  $region8: #{basic_block_forward.1} parent=0 // loop_exit
    _

</llo_original>
